<compile_context>
chip_gen: v7x
topology: tpu7x:2x2x1
jax: 0.10.0
libtpu: 0.0.40
codegen_flags: <defaults>
</compile_context>

<pallas_src>
import functools

import jax
import jax.numpy as jnp
from jax.experimental import pallas as pl
from jax.experimental.pallas import tpu as pltpu

LANE = 128      # TPU lane width
SUBLANE = 8     # TPU sublane width (f32)
HIDDEN = 128    # hidden size of the CartPole DQN


def _round_up(n, m):
    return ((n + m - 1) // m) * m


def _num_tensorcores():
    """Best-effort TensorCores-per-device detection (v7x / megacore -> 2)."""
    try:
        kind = jax.devices()[0].device_kind.lower()
    except Exception:
        return 1
    return 2 if any(tag in kind for tag in ("v7", "7x", "v4", "v5p")) else 1


def dqn_kernel(x_ref, w1_ref, w2_ref, w3_ref, b_ref, o_ref):
    """Fused 3-layer MLP on one (TB, in_dim) tile of the batch.

    Layer 1 (tiny contraction, K = in_dim) runs as in_dim broadcasted
    multiply-adds on the VPU in exact f32 (x needs no column padding and no
    MXU pass is wasted on K=4).  Layers 2/3 run on the MXU with bf16 inputs
    and f32 accumulation; bias adds and ReLU stay in f32 (v5e-safe).
    """
    x = x_ref[...]                                   # (TB, in_dim) f32
    in_dim = x.shape[1]                              # static (4)

    # ---- layer 1: VPU outer-product accumulation, exact f32 ----
    h1 = x[:, 0:1] * w1_ref[0:1, :]                  # (TB,1)*(1,128) -> (TB,128)
    for k in range(1, in_dim):                       # static, unrolled
        h1 = h1 + x[:, k:k + 1] * w1_ref[k:k + 1, :]
    h1 = jnp.maximum(h1 + b_ref[0:1, :], 0.0)

    # ---- layer 2: MXU, bf16 in / f32 accumulate ----
    h2 = jnp.dot(h1.astype(jnp.bfloat16), w2_ref[...],
                 preferred_element_type=jnp.float32) + b_ref[1:2, :]
    h2 = jnp.maximum(h2, 0.0)

    # ---- layer 3: MXU, bf16 in / f32 accumulate, lane-dense 128-wide slab ----
    out = jnp.dot(h2.astype(jnp.bfloat16), w3_ref[...],
                  preferred_element_type=jnp.float32) + b_ref[2:3, :]
    o_ref[...] = out.astype(o_ref.dtype)


def init_params(key, input_dim, output_dim, hidden_sizes=(128, 128)):
    """nn.Linear-style U(-1/sqrt(fan_in), 1/sqrt(fan_in)) init; W stored (in, out)."""
    dims = [input_dim, *hidden_sizes, output_dim]
    params = {}
    for i in range(len(dims) - 1):
        fan_in, fan_out = dims[i], dims[i + 1]
        key, kw, kb = jax.random.split(key, 3)
        bound = 1.0 / (fan_in ** 0.5)
        params[f"w{i + 1}"] = jax.random.uniform(
            kw, (fan_in, fan_out), jnp.float32, -bound, bound)
        params[f"b{i + 1}"] = jax.random.uniform(
            kb, (fan_out,), jnp.float32, -bound, bound)
    return params


def pack_params(params):
    """One-time packing/casting so every forward call issues only 5 operand DMAs.

    w1: (in, H)   f32 (used on the VPU, no padding needed)
    w2: (H, H)    bf16
    w3: (H, out) -> (H, 128) bf16, zero-padded cols (lane-dense output slab)
    b : b1,b2,b3 -> (3, 128)  packed f32 (b3 zero-padded)
    """
    w1, w2, w3 = params["w1"], params["w2"], params["w3"]
    b1, b2, b3 = params["b1"], params["b2"], params["b3"]
    in_dim, hidden = w1.shape
    out_dim = w3.shape[1]
    out_pad = _round_up(max(out_dim, LANE), LANE)
    assert hidden == HIDDEN and w2.shape == (hidden, hidden) and out_pad == hidden, (
        "bias packing assumes hidden == 128 and out_dim <= 128")

    w1_p = w1.astype(jnp.float32)
    w2_p = w2.astype(jnp.bfloat16)
    w3_p = jnp.zeros((hidden, out_pad), jnp.bfloat16).at[:, :out_dim].set(
        w3.astype(jnp.bfloat16))
    b_p = jnp.stack([
        b1.astype(jnp.float32),
        b2.astype(jnp.float32),
        jnp.zeros((out_pad,), jnp.float32).at[:out_dim].set(b3),
    ])
    return w1_p, w2_p, w3_p, b_p


@functools.partial(jax.jit, static_argnames=("out_dim", "max_tb"))
def dqn_forward(x, w1_p, w2_p, w3_p, b_p, *, out_dim, max_tb=1024):
    """x: (B, input_dim) f32 -> (B, out_dim) f32.

    Note: each distinct B recompiles; in a real DQN loop, bucket batch sizes
    (e.g. act-path B=8, learn-path B=512) so compiled executables are reused.
    """
    B, in_dim = x.shape
    hidden = w2_p.shape[0]
    out_pad = w3_p.shape[1]

    # --- grid-step selection (trace-time Python; B is static here) ---
    rows8 = _round_up(B, SUBLANE)
    if _num_tensorcores() >= 2 and rows8 >= 2 * 256:
        # dual-TC (v7x / megacore): even number of >=256-row steps, one per core
        tb = min(max_tb, _round_up(pl.cdiv(rows8, 2), 256))
    else:
        # single-TC (v5e / v6e): a single grid step for typical replay batches
        tb = min(max_tb, rows8)
    grid = pl.cdiv(B, tb)   # ragged final tile; no batch padding op

    flops = 2 * B * (in_dim * hidden + hidden * hidden + hidden * out_pad)
    bytes_accessed = (x.size * 4 + w1_p.size * 4 + w2_p.size * 2
                      + w3_p.size * 2 + b_p.size * 4 + B * out_pad * 4)

    out = pl.pallas_call(
        dqn_kernel,
        out_shape=jax.ShapeDtypeStruct((B, out_pad), jnp.float32),
        grid=(grid,),
        in_specs=[
            pl.BlockSpec((tb, in_dim), lambda i: (i, 0)),        # x tile (unpadded)
            pl.BlockSpec((in_dim, hidden), lambda i: (0, 0)),    # W1 f32 (resident)
            pl.BlockSpec((hidden, hidden), lambda i: (0, 0)),    # W2 bf16 (resident)
            pl.BlockSpec((hidden, out_pad), lambda i: (0, 0)),   # W3 bf16 (resident)
            pl.BlockSpec((3, hidden), lambda i: (0, 0)),         # packed biases
        ],
        # Lane-dense f32 slab; for very large replay batches the writeback could
        # be halved by emitting bf16 here (kept f32 to match nn.Linear output).
        out_specs=pl.BlockSpec((tb, out_pad), lambda i: (i, 0)),
        compiler_params=pltpu.CompilerParams(
            dimension_semantics=("parallel",)),                  # megacore / v7x
        cost_estimate=pl.CostEstimate(
            flops=flops, transcendentals=0, bytes_accessed=bytes_accessed),
    )(x, w1_p, w2_p, w3_p, b_p)

    return out[:, :out_dim]


def reference_forward_f32(x, params):
    h1 = jnp.maximum(x @ params["w1"] + params["b1"], 0.0)
    h2 = jnp.maximum(h1 @ params["w2"] + params["b2"], 0.0)
    return h2 @ params["w3"] + params["b3"]


def reference_forward_mixed(x, params):
    """Same recipe as the kernel: f32 layer 1, bf16-in/f32-acc layers 2 and 3."""
    bf, f32 = jnp.bfloat16, jnp.float32
    h1 = jnp.maximum(x @ params["w1"] + params["b1"], 0.0)
    h2 = jnp.maximum(
        jnp.dot(h1.astype(bf), params["w2"].astype(bf),
                preferred_element_type=f32) + params["b2"], 0.0)
    return jnp.dot(h2.astype(bf), params["w3"].astype(bf),
                   preferred_element_type=f32) + params["b3"]


if __name__ == "__main__":
    # CartPole-style shapes: state dim 4, 2 actions, hidden (128, 128).
    INPUT_DIM, OUTPUT_DIM = 4, 2
    key = jax.random.PRNGKey(0)
    key, kparam = jax.random.split(key)
    params = init_params(kparam, INPUT_DIM, OUTPUT_DIM, hidden_sizes=(128, 128))
    w1_p, w2_p, w3_p, b_p = pack_params(params)

    # Exercise both the small act-path (B=8, one tile) and the batched
    # replay-buffer learn-path (B=512: one tile on v5e/v6e, two on v7x).
    for B in (8, 512):
        key, kx = jax.random.split(key)
        x = jax.random.normal(kx, (B, INPUT_DIM), jnp.float32)

        out = dqn_forward(x, w1_p, w2_p, w3_p, b_p, out_dim=OUTPUT_DIM)
        out = jax.block_until_ready(out)
        assert out.shape == (B, OUTPUT_DIM)

        ref_mixed = reference_forward_mixed(x, params)
        ref_f32 = reference_forward_f32(x, params)
        err_mixed = float(jnp.max(jnp.abs(out - ref_mixed)))
        err_f32 = float(jnp.max(jnp.abs(out - ref_f32)))
        assert jnp.allclose(out, ref_mixed, atol=1e-2, rtol=1e-2), err_mixed
        assert jnp.allclose(out, ref_f32, atol=1e-1, rtol=1e-1), err_f32

    print("KERNEL_OK")
</pallas_src>

<mosaic_0001>
module attributes {stable_mosaic.version = 11 : i64} {
  func.func @dqn_kernel(%arg0: i32, %arg1: memref<8x4xf32, #tpu.memory_space<vmem>>, %arg2: memref<4x128xf32, #tpu.memory_space<vmem>>, %arg3: memref<128x128xbf16, #tpu.memory_space<vmem>>, %arg4: memref<128x128xbf16, #tpu.memory_space<vmem>>, %arg5: memref<3x128xf32, #tpu.memory_space<vmem>>, %arg6: memref<8x128xf32, #tpu.memory_space<vmem>>) attributes {dimension_semantics = [#tpu.dimension_semantics<parallel>], iteration_bounds = array<i64: 1>, scalar_prefetch = 0 : i64, scratch_operands = 0 : i64, tpu.core_type = #tpu.core_type<tc>, window_params = [{transform_indices = @transform_0, window_bounds = array<i64: 8, 4>}, {pipeline_mode = #tpu.pipeline_mode<synchronous>, transform_indices = @transform_1, window_bounds = array<i64: 4, 128>}, {pipeline_mode = #tpu.pipeline_mode<synchronous>, transform_indices = @transform_2, window_bounds = array<i64: 128, 128>}, {pipeline_mode = #tpu.pipeline_mode<synchronous>, transform_indices = @transform_3, window_bounds = array<i64: 128, 128>}, {pipeline_mode = #tpu.pipeline_mode<synchronous>, transform_indices = @transform_4, window_bounds = array<i64: 3, 128>}, {transform_indices = @transform_5, window_bounds = array<i64: 8, 128>}]} {
    %c0 = arith.constant 0 : index
    %c0_0 = arith.constant 0 : index
    %0 = vector.load %arg1[%c0, %c0_0] : memref<8x4xf32, #tpu.memory_space<vmem>>, vector<8x4xf32>
    %1 = vector.extract_strided_slice %0 {offsets = [0, 0], sizes = [8, 1], strides = [1, 1]} : vector<8x4xf32> to vector<8x1xf32>
    %c0_1 = arith.constant 0 : index
    %c0_2 = arith.constant 0 : index
    %2 = vector.load %arg2[%c0_1, %c0_2] : memref<4x128xf32, #tpu.memory_space<vmem>>, vector<1x128xf32>
    %3 = vector.broadcast %1 : vector<8x1xf32> to vector<8x128xf32>
    %4 = vector.broadcast %2 : vector<1x128xf32> to vector<8x128xf32>
    %5 = arith.mulf %3, %4 : vector<8x128xf32>
    %6 = vector.extract_strided_slice %0 {offsets = [0, 1], sizes = [8, 1], strides = [1, 1]} : vector<8x4xf32> to vector<8x1xf32>
    %c1 = arith.constant 1 : index
    %c0_3 = arith.constant 0 : index
    %7 = vector.load %arg2[%c1, %c0_3] : memref<4x128xf32, #tpu.memory_space<vmem>>, vector<1x128xf32>
    %8 = vector.broadcast %6 : vector<8x1xf32> to vector<8x128xf32>
    %9 = vector.broadcast %7 : vector<1x128xf32> to vector<8x128xf32>
    %10 = arith.mulf %8, %9 : vector<8x128xf32>
    %11 = arith.addf %5, %10 : vector<8x128xf32>
    %12 = vector.extract_strided_slice %0 {offsets = [0, 2], sizes = [8, 1], strides = [1, 1]} : vector<8x4xf32> to vector<8x1xf32>
    %c2 = arith.constant 2 : index
    %c0_4 = arith.constant 0 : index
    %13 = vector.load %arg2[%c2, %c0_4] : memref<4x128xf32, #tpu.memory_space<vmem>>, vector<1x128xf32>
    %14 = vector.broadcast %12 : vector<8x1xf32> to vector<8x128xf32>
    %15 = vector.broadcast %13 : vector<1x128xf32> to vector<8x128xf32>
    %16 = arith.mulf %14, %15 : vector<8x128xf32>
    %17 = arith.addf %11, %16 : vector<8x128xf32>
    %18 = vector.extract_strided_slice %0 {offsets = [0, 3], sizes = [8, 1], strides = [1, 1]} : vector<8x4xf32> to vector<8x1xf32>
    %c3 = arith.constant 3 : index
    %c0_5 = arith.constant 0 : index
    %19 = vector.load %arg2[%c3, %c0_5] : memref<4x128xf32, #tpu.memory_space<vmem>>, vector<1x128xf32>
    %20 = vector.broadcast %18 : vector<8x1xf32> to vector<8x128xf32>
    %21 = vector.broadcast %19 : vector<1x128xf32> to vector<8x128xf32>
    %22 = arith.mulf %20, %21 : vector<8x128xf32>
    %23 = arith.addf %17, %22 : vector<8x128xf32>
    %c0_6 = arith.constant 0 : index
    %c0_7 = arith.constant 0 : index
    %24 = vector.load %arg5[%c0_6, %c0_7] : memref<3x128xf32, #tpu.memory_space<vmem>>, vector<1x128xf32>
    %25 = vector.broadcast %24 : vector<1x128xf32> to vector<8x128xf32>
    %26 = arith.addf %23, %25 : vector<8x128xf32>
    %cst = arith.constant 0.000000e+00 : f32
    %27 = vector.broadcast %cst : f32 to vector<8x128xf32>
    %28 = arith.maximumf %26, %27 : vector<8x128xf32>
    %29 = arith.truncf %28 : vector<8x128xf32> to vector<8x128xbf16>
    %c0_8 = arith.constant 0 : index
    %c0_9 = arith.constant 0 : index
    %30 = vector.load %arg3[%c0_8, %c0_9] : memref<128x128xbf16, #tpu.memory_space<vmem>>, vector<128x128xbf16>
    %cst_10 = arith.constant dense<0.000000e+00> : vector<8x128xf32>
    %31 = tpu.matmul %29, %30, %cst_10 {dimension_numbers = #tpu.dot_dimension_numbers<[1], [0], [0], [1], [0, 0, 1, 1], [], []>} : vector<8x128xbf16>, vector<128x128xbf16>, vector<8x128xf32> -> vector<8x128xf32>
    %c1_11 = arith.constant 1 : index
    %c0_12 = arith.constant 0 : index
    %32 = vector.load %arg5[%c1_11, %c0_12] : memref<3x128xf32, #tpu.memory_space<vmem>>, vector<1x128xf32>
    %33 = vector.broadcast %32 : vector<1x128xf32> to vector<8x128xf32>
    %34 = arith.addf %31, %33 : vector<8x128xf32>
    %cst_13 = arith.constant 0.000000e+00 : f32
    %35 = vector.broadcast %cst_13 : f32 to vector<8x128xf32>
    %36 = arith.maximumf %34, %35 : vector<8x128xf32>
    %37 = arith.truncf %36 : vector<8x128xf32> to vector<8x128xbf16>
    %c0_14 = arith.constant 0 : index
    %c0_15 = arith.constant 0 : index
    %38 = vector.load %arg4[%c0_14, %c0_15] : memref<128x128xbf16, #tpu.memory_space<vmem>>, vector<128x128xbf16>
    %cst_16 = arith.constant dense<0.000000e+00> : vector<8x128xf32>
    %39 = tpu.matmul %37, %38, %cst_16 {dimension_numbers = #tpu.dot_dimension_numbers<[1], [0], [0], [1], [0, 0, 1, 1], [], []>} : vector<8x128xbf16>, vector<128x128xbf16>, vector<8x128xf32> -> vector<8x128xf32>
    %c2_17 = arith.constant 2 : index
    %c0_18 = arith.constant 0 : index
    %40 = vector.load %arg5[%c2_17, %c0_18] : memref<3x128xf32, #tpu.memory_space<vmem>>, vector<1x128xf32>
    %41 = vector.broadcast %40 : vector<1x128xf32> to vector<8x128xf32>
    %42 = arith.addf %39, %41 : vector<8x128xf32>
    %c0_19 = arith.constant 0 : index
    %c0_20 = arith.constant 0 : index
    %43 = vector.load %arg6[%c0_19, %c0_20] : memref<8x128xf32, #tpu.memory_space<vmem>>, vector<8x128xf32>
    tpu.vector_store %arg6[%c0_19, %c0_20], %42 {strides = array<i32>} : memref<8x128xf32, #tpu.memory_space<vmem>>, vector<8x128xf32>,
    return
  }
  func.func @transform_0(%arg0: i32) -> (i32, i32) {
    %c0_i32 = arith.constant 0 : i32
    %c0_i32_0 = arith.constant 0 : i32
    return %arg0, %c0_i32 : i32, i32
  }
  func.func @transform_1(%arg0: i32) -> (i32, i32) {
    %c0_i32 = arith.constant 0 : i32
    %c0_i32_0 = arith.constant 0 : i32
    %c0_i32_1 = arith.constant 0 : i32
    return %c0_i32, %c0_i32_0 : i32, i32
  }
  func.func @transform_2(%arg0: i32) -> (i32, i32) {
    %c0_i32 = arith.constant 0 : i32
    %c0_i32_0 = arith.constant 0 : i32
    %c0_i32_1 = arith.constant 0 : i32
    return %c0_i32, %c0_i32_0 : i32, i32
  }
  func.func @transform_3(%arg0: i32) -> (i32, i32) {
    %c0_i32 = arith.constant 0 : i32
    %c0_i32_0 = arith.constant 0 : i32
    %c0_i32_1 = arith.constant 0 : i32
    return %c0_i32, %c0_i32_0 : i32, i32
  }
  func.func @transform_4(%arg0: i32) -> (i32, i32) {
    %c0_i32 = arith.constant 0 : i32
    %c0_i32_0 = arith.constant 0 : i32
    %c0_i32_1 = arith.constant 0 : i32
    return %c0_i32, %c0_i32_0 : i32, i32
  }
  func.func @transform_5(%arg0: i32) -> (i32, i32) {
    %c0_i32 = arith.constant 0 : i32
    %c0_i32_0 = arith.constant 0 : i32
    return %arg0, %c0_i32 : i32, i32
  }
}

</mosaic_0001>

<llo_original>
// kernel: dqn_forward.1
$region0: #{dqn_forward.1}
  #allocation0 [shape = 'u32[]', space=smem, size = 0x4, offset = 0x4, fixed_abs, tag = 'smem constant byte address 0x4 - core index']
  #allocation1 [shape = 'u32[144,128]{1,0:T(1,128)}', space=vmem, size = 0x12000, scoped, tag = 'internal scratch']
  %s0 = inlined_call_operand.vmem [shape: f32[8,4], index: 0, kind: input, shape index: {}]
  %s1 = inlined_call_operand.vmem [shape: f32[4,128], index: 1, kind: input, shape index: {}]
  %s2 = inlined_call_operand.hbm [shape: bf16[128,128], index: 2, kind: input, shape index: {}]
  %s3 = inlined_call_operand.hbm [shape: bf16[128,128], index: 3, kind: input, shape index: {}]
  %s4 = inlined_call_operand.vmem [shape: f32[3,128], index: 4, kind: input, shape index: {}]
  %s5 = inlined_call_operand.vmem [shape: f32[8,128], index: 5, kind: output, shape index: {}]
  %s6 = sld [smem:[#allocation0]]
  $region38: #{dqn_forward.1} parent=0
    _
  %s8 = ssub.s32 1, %s6
  %s9 = scalar_select 0, %s8, %s6
  $region1: #{dqn_forward.1} parent=0
    #allocation2 [shape = 'u8[32768]{0}', space=vmem, size = 0x8000, scoped, tag = 'input window, operand 2, single buffered']
    #allocation3 [shape = 's32[1]{0}', space=sflag, size = 0x4, scoped, tag = 'scoped memory for dqn_forward.1']
    #allocation4 [shape = 'u8[32768]{0}', space=vmem, size = 0x8000, scoped, tag = 'input window, operand 3, single buffered']
    #allocation5 [shape = 's32[1]{0}', space=sflag, size = 0x4, scoped, tag = 'scoped memory for dqn_forward.1']
    %10 = vsyncpa [#allocation3], 0
    %11 = vsyncpa [#allocation5], 0
    // Predicated region
    $region2: #{dqn_forward.1} parent=1 // pred_check
      _
    $region3: #{dqn_forward.1} parent=1 // pred_check_branch
      %13 = sbr.rel (0) target = $region5
    $region4: #{dqn_forward.1} parent=1 // pred_region
      _
    $region5: #{dqn_forward.1} parent=1 // pred_fallthru
      _
    // Predicated region
    $region6: #{dqn_forward.1} parent=1 // pred_check
      _
    $region7: #{dqn_forward.1} parent=1 // pred_check_branch
      %15 = sbr.rel (0) target = $region9
    $region8: #{dqn_forward.1} parent=1 // pred_region
      _
    $region9: #{dqn_forward.1} parent=1 // pred_fallthru
      _
    // Predicated region
    $region10: #{dqn_forward.1} parent=1 // pred_check
      _
    $region11: #{dqn_forward.1} parent=1 // pred_check_branch
      %17 = sbr.rel (0) target = $region13
    $region12: #{dqn_forward.1} parent=1 // pred_region
      %s19 = ssub.s32 1024, 1024
      %20 = vsyncadd [#allocation3], %s19
      %s21 = sshll.u32 [#allocation2], 4
      %s22 = int_to_ptr.vmem [resolvable:$true] %s21
      %27 = dma.hbm_to_vmem [thread:$0]  %s2, 1024, %s22, [#allocation3], 64, 64, 4
    $region13: #{dqn_forward.1} parent=1 // pred_fallthru
      _
    // Predicated region
    $region14: #{dqn_forward.1} parent=1 // pred_check
      _
    $region15: #{dqn_forward.1} parent=1 // pred_check_branch
      %29 = sbr.rel (0) target = $region17
    $region16: #{dqn_forward.1} parent=1 // pred_region
      %s31 = ssub.s32 1024, 1024
      %32 = vsyncadd [#allocation5], %s31
      %s33 = sshll.u32 [#allocation4], 4
      %s34 = int_to_ptr.vmem [resolvable:$true] %s33
      %39 = dma.hbm_to_vmem [thread:$0]  %s3, 1024, %s34, [#allocation5], 64, 64, 4
    $region17: #{dqn_forward.1} parent=1 // pred_fallthru
      _
    // Predicated region
    $region18: #{dqn_forward.1} parent=1 // pred_check
      _
    $region19: #{dqn_forward.1} parent=1 // pred_check_branch
      %41 = sbr.rel (0) target = $region21
    $region20: #{dqn_forward.1} parent=1 // pred_region
      _
    $region21: #{dqn_forward.1} parent=1 // pred_fallthru
      _
    // Predicated region
    $region22: #{dqn_forward.1} parent=1 // pred_check
      _
    $region23: #{dqn_forward.1} parent=1 // pred_check_branch
      %43 = sbr.rel (0) target = $region25
    $region24: #{dqn_forward.1} parent=1 // pred_region
      %44 = dma.done [#allocation3], 1024
    $region25: #{dqn_forward.1} parent=1 // pred_fallthru
      _
    // Predicated region
    $region26: #{dqn_forward.1} parent=1 // pred_check
      _
    $region27: #{dqn_forward.1} parent=1 // pred_check_branch
      %46 = sbr.rel (0) target = $region29
    $region28: #{dqn_forward.1} parent=1 // pred_region
      %47 = dma.done [#allocation5], 1024
    $region29: #{dqn_forward.1} parent=1 // pred_fallthru
      _
    %v49 = vld [vmem:[%s0] sm:$0xff]
    %v50 = vld [vmem:[%s1] sm:$0x1]
    %52 = vset.pattern.permute.xlu0 0
    %53 = vperm.xlu0 %52, %v49
    %v54 = vpop.permute.xlu0 %53
    %v56 = vlaneseq
    %v57 = vshrl.u32 %v56, 7
    %v58 = vsub.s32 0, %v57
    %v59 = vrot.slane %v50, %v58
    %v60 = vmul.f32 %v54, %v59
    %v61 = vld [vmem:[%s1 + $0x1] sm:$0x1]
    %62 = vset.pattern.permute.xlu0 1
    %63 = vperm.xlu0 %62, %v49
    %v64 = vpop.permute.xlu0 %63
    %v66 = vlaneseq
    %v67 = vshrl.u32 %v66, 7
    %v68 = vsub.s32 0, %v67
    %v69 = vrot.slane %v61, %v68
    %v70 = vmul.f32 %v64, %v69
    %v71 = vadd.f32 %v60, %v70
    %v72 = vld [vmem:[%s1 + $0x2] sm:$0x1]
    %73 = vset.pattern.permute.xlu0 2
    %74 = vperm.xlu0 %73, %v49
    %v75 = vpop.permute.xlu0 %74
    %v77 = vlaneseq
    %v78 = vshrl.u32 %v77, 7
    %v79 = vsub.s32 0, %v78
    %v80 = vrot.slane %v72, %v79
    %v81 = vmul.f32 %v75, %v80
    %v82 = vadd.f32 %v71, %v81
    %v83 = vld [vmem:[%s1 + $0x3] sm:$0x1]
    %84 = vset.pattern.permute.xlu0 3
    %85 = vperm.xlu0 %84, %v49
    %v86 = vpop.permute.xlu0 %85
    %v88 = vlaneseq
    %v89 = vshrl.u32 %v88, 7
    %v90 = vsub.s32 0, %v89
    %v91 = vrot.slane %v83, %v90
    %v92 = vmul.f32 %v86, %v91
    %v93 = vadd.f32 %v82, %v92
    %v94 = vld [vmem:[%s4] sm:$0x1]
    %v95 = vlaneseq
    %v96 = vshrl.u32 %v95, 7
    %v97 = vsub.s32 0, %v96
    %v98 = vrot.slane %v94, %v97
    %v99 = vadd.f32 %v93, %v98
    %v100 = vmax.f32 %v99, 0.0
    %v101 = vpack.c.bf16 %v100, %v100
    %v102 = vld [vmem:[#allocation2] sm:$0xf]
    %v103 = vld [vmem:[#allocation2 + $0x4] sm:$0xf]
    %v104 = vld [vmem:[#allocation2 + $0x8] sm:$0xf]
    %v105 = vld [vmem:[#allocation2 + $0xc] sm:$0xf]
    %v106 = vld [vmem:[#allocation2 + $0x10] sm:$0xf]
    %v107 = vld [vmem:[#allocation2 + $0x14] sm:$0xf]
    %v108 = vld [vmem:[#allocation2 + $0x18] sm:$0xf]
    %v109 = vld [vmem:[#allocation2 + $0x1c] sm:$0xf]
    %v110 = vld [vmem:[#allocation2 + $0x20] sm:$0xf]
    %v111 = vld [vmem:[#allocation2 + $0x24] sm:$0xf]
    %v112 = vld [vmem:[#allocation2 + $0x28] sm:$0xf]
    %v113 = vld [vmem:[#allocation2 + $0x2c] sm:$0xf]
    %v114 = vld [vmem:[#allocation2 + $0x30] sm:$0xf]
    %v115 = vld [vmem:[#allocation2 + $0x34] sm:$0xf]
    %v116 = vld [vmem:[#allocation2 + $0x38] sm:$0xf]
    %v117 = vld [vmem:[#allocation2 + $0x3c] sm:$0xf]
    %v118 = vld [vmem:[%s4 + $0x1] sm:$0x1]
    %v119 = vlaneseq
    %v120 = vshrl.u32 %v119, 7
    %v121 = vsub.s32 0, %v120
    %v122 = vrot.slane %v118, %v121
    %v139 = vunpack.c.l.b16 %v102
    %v140 = vunpack.c.l.b16 %v103
    %v141 = vunpack.c.l.b16 %v104
    %v142 = vunpack.c.l.b16 %v105
    %v143 = vunpack.c.l.b16 %v106
    %v144 = vunpack.c.l.b16 %v107
    %v145 = vunpack.c.l.b16 %v108
    %v146 = vunpack.c.l.b16 %v109
    %v147 = vunpack.c.l.b16 %v110
    %v148 = vunpack.c.l.b16 %v111
    %v149 = vunpack.c.l.b16 %v112
    %v150 = vunpack.c.l.b16 %v113
    %v151 = vunpack.c.l.b16 %v114
    %v152 = vunpack.c.l.b16 %v115
    %v153 = vunpack.c.l.b16 %v116
    %v154 = vunpack.c.l.b16 %v117
    %v155 = vpack.c.b16 %v140, %v139
    %v156 = vpack.c.b16 %v142, %v141
    %v157 = vpack.c.b16 %v144, %v143
    %v158 = vpack.c.b16 %v146, %v145
    %v159 = vpack.c.b16 %v148, %v147
    %v160 = vpack.c.b16 %v150, %v149
    %v161 = vpack.c.b16 %v152, %v151
    %v162 = vpack.c.b16 %v154, %v153
    %171 = vmatprep.subr.bf16.mxu0 0
    %172 = vmatpush1.bf16.msra.mxu0 %v155
    %173 = vmatprep.subr.bf16.mxu0 0
    %174 = vmatpush1.bf16.msra.mxu0 %v156
    %175 = vmatprep.subr.bf16.mxu0 0
    %176 = vmatpush1.bf16.msra.mxu0 %v157
    %177 = vmatprep.subr.bf16.mxu0 0
    %178 = vmatpush1.bf16.msra.mxu0 %v158
    %179 = vmatprep.subr.bf16.mxu0 0
    %180 = vmatpush1.bf16.msra.mxu0 %v159
    %181 = vmatprep.subr.bf16.mxu0 0
    %182 = vmatpush1.bf16.msra.mxu0 %v160
    %183 = vmatprep.subr.bf16.mxu0 0
    %184 = vmatpush1.bf16.msra.mxu0 %v161
    %185 = vmatprep.subr.bf16.mxu0 0
    %186 = vmatpush1.bf16.msra.mxu0 %v162
    %187 = vmatprep.subr.bf16.mxu0 0
    %188 = vmatpush1.bf16.msra.mxu0 0
    %189 = vmatprep.subr.bf16.mxu0 0
    %190 = vmatpush1.bf16.msra.mxu0 0
    %191 = vmatprep.subr.bf16.mxu0 0
    %192 = vmatpush1.bf16.msra.mxu0 0
    %193 = vmatprep.subr.bf16.mxu0 0
    %194 = vmatpush1.bf16.msra.mxu0 0
    %195 = vmatprep.subr.bf16.mxu0 0
    %196 = vmatpush1.bf16.msra.mxu0 0
    %197 = vmatprep.subr.bf16.mxu0 0
    %198 = vmatpush1.bf16.msra.mxu0 0
    %199 = vmatprep.subr.bf16.mxu0 0
    %200 = vmatpush1.bf16.msra.mxu0 0
    %201 = vmatprep.subr.bf16.mxu0 0
    %202 = vmatpush1.bf16.msra.mxu0 0
    %203 = vmatprep.mubr.bf16.mxu0 0
    %204 = vmatmul.mubr.bf16.gmra.mrb[0].mxu0 %v101
    %v205 = vpop.f32.mrb[0].mxu0
    %v206 = vadd.f32 %v122, %v205
    %v207 = vpop.f32.mrb[0].mxu0
    %v208 = vpop.f32.mrb[0].mxu0
    %v209 = vpop.f32.mrb[0].mxu0
    %210 = vdwg.mxu0
    %v211 = vmax.f32 %v206, 0.0
    %v212 = vpack.c.bf16 %v211, %v211
    %v213 = vld [vmem:[#allocation4] sm:$0xf]
    %v214 = vld [vmem:[#allocation4 + $0x4] sm:$0xf]
    %v215 = vld [vmem:[#allocation4 + $0x8] sm:$0xf]
    %v216 = vld [vmem:[#allocation4 + $0xc] sm:$0xf]
    %v217 = vld [vmem:[#allocation4 + $0x10] sm:$0xf]
    %v218 = vld [vmem:[#allocation4 + $0x14] sm:$0xf]
    %v219 = vld [vmem:[#allocation4 + $0x18] sm:$0xf]
    %v220 = vld [vmem:[#allocation4 + $0x1c] sm:$0xf]
    %v221 = vld [vmem:[#allocation4 + $0x20] sm:$0xf]
    %v222 = vld [vmem:[#allocation4 + $0x24] sm:$0xf]
    %v223 = vld [vmem:[#allocation4 + $0x28] sm:$0xf]
    %v224 = vld [vmem:[#allocation4 + $0x2c] sm:$0xf]
    %v225 = vld [vmem:[#allocation4 + $0x30] sm:$0xf]
    %v226 = vld [vmem:[#allocation4 + $0x34] sm:$0xf]
    %v227 = vld [vmem:[#allocation4 + $0x38] sm:$0xf]
    %v228 = vld [vmem:[#allocation4 + $0x3c] sm:$0xf]
    %v229 = vld [vmem:[%s4 + $0x2] sm:$0x1]
    %v230 = vlaneseq
    %v231 = vshrl.u32 %v230, 7
    %v232 = vsub.s32 0, %v231
    %v233 = vrot.slane %v229, %v232
    %v250 = vunpack.c.l.b16 %v213
    %v251 = vunpack.c.l.b16 %v214
    %v252 = vunpack.c.l.b16 %v215
    %v253 = vunpack.c.l.b16 %v216
    %v254 = vunpack.c.l.b16 %v217
    %v255 = vunpack.c.l.b16 %v218
    %v256 = vunpack.c.l.b16 %v219
    %v257 = vunpack.c.l.b16 %v220
    %v258 = vunpack.c.l.b16 %v221
    %v259 = vunpack.c.l.b16 %v222
    %v260 = vunpack.c.l.b16 %v223
    %v261 = vunpack.c.l.b16 %v224
    %v262 = vunpack.c.l.b16 %v225
    %v263 = vunpack.c.l.b16 %v226
    %v264 = vunpack.c.l.b16 %v227
    %v265 = vunpack.c.l.b16 %v228
    %v266 = vpack.c.b16 %v251, %v250
    %v267 = vpack.c.b16 %v253, %v252
    %v268 = vpack.c.b16 %v255, %v254
    %v269 = vpack.c.b16 %v257, %v256
    %v270 = vpack.c.b16 %v259, %v258
    %v271 = vpack.c.b16 %v261, %v260
    %v272 = vpack.c.b16 %v263, %v262
    %v273 = vpack.c.b16 %v265, %v264
    %282 = vmatprep.subr.bf16.mxu0 0
    %283 = vmatpush1.bf16.msra.mxu0 %v266
    %284 = vmatprep.subr.bf16.mxu0 0
    %285 = vmatpush1.bf16.msra.mxu0 %v267
    %286 = vmatprep.subr.bf16.mxu0 0
    %287 = vmatpush1.bf16.msra.mxu0 %v268
    %288 = vmatprep.subr.bf16.mxu0 0
    %289 = vmatpush1.bf16.msra.mxu0 %v269
    %290 = vmatprep.subr.bf16.mxu0 0
    %291 = vmatpush1.bf16.msra.mxu0 %v270
    %292 = vmatprep.subr.bf16.mxu0 0
    %293 = vmatpush1.bf16.msra.mxu0 %v271
    %294 = vmatprep.subr.bf16.mxu0 0
    %295 = vmatpush1.bf16.msra.mxu0 %v272
    %296 = vmatprep.subr.bf16.mxu0 0
    %297 = vmatpush1.bf16.msra.mxu0 %v273
    %298 = vmatprep.subr.bf16.mxu0 0
    %299 = vmatpush1.bf16.msra.mxu0 0
    %300 = vmatprep.subr.bf16.mxu0 0
    %301 = vmatpush1.bf16.msra.mxu0 0
    %302 = vmatprep.subr.bf16.mxu0 0
    %303 = vmatpush1.bf16.msra.mxu0 0
    %304 = vmatprep.subr.bf16.mxu0 0
    %305 = vmatpush1.bf16.msra.mxu0 0
    %306 = vmatprep.subr.bf16.mxu0 0
    %307 = vmatpush1.bf16.msra.mxu0 0
    %308 = vmatprep.subr.bf16.mxu0 0
    %309 = vmatpush1.bf16.msra.mxu0 0
    %310 = vmatprep.subr.bf16.mxu0 0
    %311 = vmatpush1.bf16.msra.mxu0 0
    %312 = vmatprep.subr.bf16.mxu0 0
    %313 = vmatpush1.bf16.msra.mxu0 0
    %314 = vmatprep.mubr.bf16.mxu0 0
    %315 = vmatmul.mubr.bf16.gmra.mrb[0].mxu0 %v212
    %v316 = vpop.f32.mrb[0].mxu0
    %v317 = vadd.f32 %v233, %v316
    %v318 = vpop.f32.mrb[0].mxu0
    %v319 = vpop.f32.mrb[0].mxu0
    %v320 = vpop.f32.mrb[0].mxu0
    %321 = vdwg.mxu0
    %322 = vst [vmem:[%s5] sm:$0xff] %v317
    // Predicated region
    $region30: #{dqn_forward.1} parent=1 // pred_check
      _
    $region31: #{dqn_forward.1} parent=1 // pred_check_branch
      %324 = sbr.rel (0) target = $region33
    $region32: #{dqn_forward.1} parent=1 // pred_region
      _
    $region33: #{dqn_forward.1} parent=1 // pred_fallthru
      _
    // Predicated region
    $region34: #{dqn_forward.1} parent=1 // pred_check
      _
    $region35: #{dqn_forward.1} parent=1 // pred_check_branch
      %326 = sbr.rel (0) target = $region37
    $region36: #{dqn_forward.1} parent=1 // pred_region
      _
    $region37: #{dqn_forward.1} parent=1 // pred_fallthru
      _
    %327 = vsyncpa [#allocation3], 1
    %328 = vsyncpa [#allocation5], 1

</llo_original>
